<compile_context>
chip_gen: v7x
topology: tpu7x:2x2x1
jax: 0.10.0
libtpu: 0.0.40
codegen_flags: <defaults>
</compile_context>

<pallas_src>
import math
import functools

import jax
import jax.numpy as jnp
from jax.experimental import pallas as pl
from jax.experimental.pallas import tpu as pltpu


# ---------------------------------------------------------------------------
# Parameter ("buffer") construction — deterministic, mirrors nn.Module.__init__
# ---------------------------------------------------------------------------
def make_positional_encoding(d_model: int, max_len: int = 5000) -> jnp.ndarray:
    position = jnp.arange(max_len, dtype=jnp.float32)[:, None]            # [max_len, 1]
    div_term = jnp.exp(
        jnp.arange(0, d_model, 2, dtype=jnp.float32) * (-math.log(10000.0) / d_model)
    )                                                                      # [d_model//2]
    pe = jnp.zeros((max_len, 1, d_model), dtype=jnp.float32)
    pe = pe.at[:, 0, 0::2].set(jnp.sin(position * div_term))
    pe = pe.at[:, 0, 1::2].set(jnp.cos(position * div_term))
    return pe                                                              # [max_len, 1, d_model]


# ---------------------------------------------------------------------------
# Kernels
# ---------------------------------------------------------------------------
def _pe_add_kernel(x_ref, pe_ref, o_ref, *, batch: int):
    # x_ref: (ts, B*D)   pe_ref: (ts, D) -> replicate pe along lanes for each batch.
    o_ref[...] = x_ref[...] + jnp.tile(pe_ref[...], (1, batch))


def _pe_add_dropout_kernel(seed_ref, x_ref, pe_ref, o_ref, *, p: float, batch: int):
    ts, bd = x_ref.shape  # static block shape
    y = x_ref[...] + jnp.tile(pe_ref[...], (1, batch))

    # Stateless per-element hash PRNG (murmur-style finalizer). Pure integer VPU
    # ops: works on TPU and in CPU interpret mode, and keeps blocks independent.
    row = jax.lax.broadcasted_iota(jnp.int32, (ts, bd), 0).astype(jnp.uint32)
    col = jax.lax.broadcasted_iota(jnp.int32, (ts, bd), 1).astype(jnp.uint32)
    blk = pl.program_id(0).astype(jnp.uint32)
    seed = seed_ref[0].astype(jnp.uint32)

    idx = (blk * jnp.uint32(ts) + row) * jnp.uint32(bd) + col
    h = idx * jnp.uint32(0x9E3779B9) + seed * jnp.uint32(0x85EBCA6B) + jnp.uint32(0x27220A95)
    h = h ^ (h >> 16)
    h = h * jnp.uint32(0x7FEB352D)
    h = h ^ (h >> 15)
    h = h * jnp.uint32(0x846CA68B)
    h = h ^ (h >> 16)

    # Integer-threshold compare: keep with probability exactly 1-p (to 2^-32).
    thr = jnp.uint32(min(int(p * (1 << 32)), (1 << 32) - 1))
    keep = h >= thr
    scale = jnp.float32(1.0 / (1.0 - p))
    o_ref[...] = jnp.where(keep, y * scale, jnp.float32(0.0)).astype(o_ref.dtype)


# ---------------------------------------------------------------------------
# Tiling heuristic
# ---------------------------------------------------------------------------
def _choose_seq_tile(S: int, row_bytes: int, budget_bytes: int = 2 << 20) -> int:
    """Largest divisor of S that is a multiple of 8 (or S itself) fitting budget."""
    candidates = [t for t in range(1, S + 1) if S % t == 0 and (t % 8 == 0 or t == S)]
    fitting = [t for t in candidates if t * row_bytes <= budget_bytes]
    if fitting:
        return max(fitting)
    return min(candidates)  # nothing fits the budget; take the smallest legal tile


# ---------------------------------------------------------------------------
# Wrapper
# ---------------------------------------------------------------------------
def positional_encoding_forward(x, pe, *, p: float = 0.1, train: bool = False,
                                seed: int = 0, seq_tile: int | None = None):
    """x: [S, B, D] float32, pe: [max_len, 1, D] float32."""
    S, B, D = x.shape
    BD = B * D

    # Lane-dense presentation: x/out as [S, B*D], pe squeezed to [max_len, D].
    x2 = x.reshape(S, BD)
    pe2 = pe[:, 0, :]

    if seq_tile is None:
        seq_tile = _choose_seq_tile(S, row_bytes=BD * x.dtype.itemsize)
    assert S % seq_tile == 0, "seq_tile must divide seq_len"
    grid = (S // seq_tile,)

    x_spec = pl.BlockSpec((seq_tile, BD), lambda i, *_: (i, 0))
    pe_spec = pl.BlockSpec((seq_tile, D), lambda i, *_: (i, 0))
    o_spec = pl.BlockSpec((seq_tile, BD), lambda i, *_: (i, 0))
    out_shape = jax.ShapeDtypeStruct((S, BD), x.dtype)

    compiler_params = pltpu.CompilerParams(dimension_semantics=("parallel",))

    if (not train) or p == 0.0:
        out2 = pl.pallas_call(
            functools.partial(_pe_add_kernel, batch=B),
            out_shape=out_shape,
            grid_spec=pltpu.PrefetchScalarGridSpec(
                num_scalar_prefetch=0,
                grid=grid,
                in_specs=[x_spec, pe_spec],
                out_specs=o_spec,
            ),
            compiler_params=compiler_params,
        )(x2, pe2)
        return out2.reshape(S, B, D)

    # Training path: in-kernel dropout via stateless hash PRNG.
    # TODO(synk): stream is deterministic but does not reproduce torch's RNG bit-for-bit.
    seed_arr = jnp.array([seed], dtype=jnp.int32)
    out2 = pl.pallas_call(
        functools.partial(_pe_add_dropout_kernel, p=p, batch=B),
        out_shape=out_shape,
        grid_spec=pltpu.PrefetchScalarGridSpec(
            num_scalar_prefetch=1,
            grid=grid,
            in_specs=[x_spec, pe_spec],
            out_specs=o_spec,
        ),
        compiler_params=compiler_params,
    )(seed_arr, x2, pe2)
    return out2.reshape(S, B, D)


# ---------------------------------------------------------------------------
# Demo / test
# ---------------------------------------------------------------------------
if __name__ == "__main__":
    d_model = 128
    max_len = 5000
    seq_len, batch = 16, 4
    p = 0.1

    key = jax.random.PRNGKey(0)
    x = jax.random.normal(key, (seq_len, batch, d_model), dtype=jnp.float32)

    pe = make_positional_encoding(d_model, max_len)
    ref = x + pe[:seq_len]

    # Inference (dropout = identity): check against reference x + pe[:S]
    out_eval = positional_encoding_forward(x, pe, p=p, train=False)
    out_eval = jax.block_until_ready(out_eval)
    assert out_eval.shape == (seq_len, batch, d_model)
    assert jnp.allclose(out_eval, ref, atol=1e-6), "eval-mode mismatch vs reference"

    # Training mode (in-kernel stochastic dropout).
    out_train = positional_encoding_forward(x, pe, p=p, train=True, seed=1234)
    out_train = jax.block_until_ready(out_train)
    assert out_train.shape == (seq_len, batch, d_model)
    # dropped elements are exactly zero; kept elements are scaled by 1/(1-p)
    nz = out_train != 0.0
    assert jnp.allclose(jnp.where(nz, out_train, 0.0),
                        jnp.where(nz, ref / (1.0 - p), 0.0), atol=1e-5)
    # loose sanity check on drop rate (p=0.1, n=8192)
    drop_frac = 1.0 - jnp.mean(nz.astype(jnp.float32))
    assert 0.03 <= float(drop_frac) <= 0.25, f"unexpected drop fraction {drop_frac}"

    print("KERNEL_OK")
</pallas_src>

<mosaic_0001>
module attributes {stable_mosaic.version = 11 : i64} {
  func.func @_pe_add_kernel(%arg0: i32, %arg1: memref<16x512xf32, #tpu.memory_space<vmem>>, %arg2: memref<16x128xf32, #tpu.memory_space<vmem>>, %arg3: memref<16x512xf32, #tpu.memory_space<vmem>>) attributes {dimension_semantics = [#tpu.dimension_semantics<parallel>], iteration_bounds = array<i64: 1>, scalar_prefetch = 0 : i64, scratch_operands = 0 : i64, tpu.core_type = #tpu.core_type<tc>, window_params = [{transform_indices = @transform_0, window_bounds = array<i64: 16, 512>}, {transform_indices = @transform_1, window_bounds = array<i64: 16, 128>}, {transform_indices = @transform_2, window_bounds = array<i64: 16, 512>}]} {
    %c0 = arith.constant 0 : index
    %c0_0 = arith.constant 0 : index
    %0 = vector.load %arg1[%c0, %c0_0] : memref<16x512xf32, #tpu.memory_space<vmem>>, vector<16x512xf32>
    %c0_1 = arith.constant 0 : index
    %c0_2 = arith.constant 0 : index
    %1 = vector.load %arg2[%c0_1, %c0_2] : memref<16x128xf32, #tpu.memory_space<vmem>>, vector<16x128xf32>
    %2 = tpu.concatenate %1, %1, %1, %1 in 1 : vector<16x128xf32>, vector<16x128xf32>, vector<16x128xf32>, vector<16x128xf32> -> vector<16x512xf32>
    %3 = arith.addf %0, %2 : vector<16x512xf32>
    %c0_3 = arith.constant 0 : index
    %c0_4 = arith.constant 0 : index
    %4 = vector.load %arg3[%c0_3, %c0_4] : memref<16x512xf32, #tpu.memory_space<vmem>>, vector<16x512xf32>
    tpu.vector_store %arg3[%c0_3, %c0_4], %3 {strides = array<i32>} : memref<16x512xf32, #tpu.memory_space<vmem>>, vector<16x512xf32>,
    return
  }
  func.func @transform_0(%arg0: i32) -> (i32, i32) {
    %c0_i32 = arith.constant 0 : i32
    %c0_i32_0 = arith.constant 0 : i32
    return %arg0, %c0_i32 : i32, i32
  }
  func.func @transform_1(%arg0: i32) -> (i32, i32) {
    %c0_i32 = arith.constant 0 : i32
    %c0_i32_0 = arith.constant 0 : i32
    return %arg0, %c0_i32 : i32, i32
  }
  func.func @transform_2(%arg0: i32) -> (i32, i32) {
    %c0_i32 = arith.constant 0 : i32
    %c0_i32_0 = arith.constant 0 : i32
    return %arg0, %c0_i32 : i32, i32
  }
}

</mosaic_0001>

<llo_original>
// kernel: tpu_custom_call.1
$region0: #{tpu_custom_call.1}
  #allocation0 [shape = 'u32[]', space=smem, size = 0x4, offset = 0x4, fixed_abs, tag = 'smem constant byte address 0x4 - core index']
  #allocation1 [shape = 'u32[144,128]{1,0:T(1,128)}', space=vmem, size = 0x12000, scoped, tag = 'internal scratch']
  %s0 = inlined_call_operand.hbm [shape: f32[16,512], index: 0, kind: input, shape index: {}]
  %s1 = inlined_call_operand.hbm [shape: f32[5000,128], index: 1, kind: input, shape index: {}]
  %s2 = inlined_call_operand.hbm [shape: f32[16,512], index: 2, kind: output, shape index: {}]
  %s3 = sld [smem:[#allocation0]]
  $region26: #{tpu_custom_call.1} parent=0
    _
  %s5 = ssub.s32 1, %s3
  %s6 = scalar_select 0, %s5, %s3
  $region1: #{tpu_custom_call.1} parent=0
    #allocation2 [shape = 'u8[32768]{0}', space=vmem, size = 0x8000, scoped, tag = 'input window, operand 0, single buffered']
    #allocation3 [shape = 's32[1]{0}', space=sflag, size = 0x4, scoped, tag = 'scoped memory for tpu_custom_call.1']
    #allocation4 [shape = 's32[1]{0}', space=sflag, size = 0x4, scoped, tag = 'scoped memory for tpu_custom_call.1']
    #allocation5 [shape = 'u8[8192]{0}', space=vmem, size = 0x2000, scoped, tag = 'input window, operand 1, single buffered']
    #allocation6 [shape = 's32[1]{0}', space=sflag, size = 0x4, scoped, tag = 'scoped memory for tpu_custom_call.1']
    #allocation7 [shape = 'u8[32768]{0}', space=vmem, size = 0x8000, scoped, tag = 'output window, operand 0, single buffered']
    %7 = vsyncpa [#allocation3], 0
    %8 = vsyncpa [#allocation6], 0
    %9 = vsyncpa [#allocation4], 0
    // Predicated region
    $region2: #{tpu_custom_call.1} parent=1 // pred_check
      _
    $region3: #{tpu_custom_call.1} parent=1 // pred_check_branch
      %11 = sbr.rel (0) target = $region5
    $region4: #{tpu_custom_call.1} parent=1 // pred_region
      %s13 = ssub.s32 1024, 1024
      %14 = vsyncadd [#allocation3], %s13
      %s15 = sshll.u32 [#allocation2], 4
      %s16 = int_to_ptr.vmem [resolvable:$true] %s15
      %21 = dma.hbm_to_vmem [thread:$0]  %s0, 1024, %s16, [#allocation3], 512, 512, 32
    $region5: #{tpu_custom_call.1} parent=1 // pred_fallthru
      _
    // Predicated region
    $region6: #{tpu_custom_call.1} parent=1 // pred_check
      _
    $region7: #{tpu_custom_call.1} parent=1 // pred_check_branch
      %23 = sbr.rel (0) target = $region9
    $region8: #{tpu_custom_call.1} parent=1 // pred_region
      %s25 = ssub.s32 256, 256
      %26 = vsyncadd [#allocation6], %s25
      %s27 = sshll.u32 [#allocation5], 4
      %s28 = int_to_ptr.vmem [resolvable:$true] %s27
      %33 = dma.hbm_to_vmem [thread:$0]  %s1, 256, %s28, [#allocation6], 128, 128, 8
    $region9: #{tpu_custom_call.1} parent=1 // pred_fallthru
      _
    // Predicated region
    $region10: #{tpu_custom_call.1} parent=1 // pred_check
      _
    $region11: #{tpu_custom_call.1} parent=1 // pred_check_branch
      %35 = sbr.rel (0) target = $region13
    $region12: #{tpu_custom_call.1} parent=1 // pred_region
      %36 = dma.done [#allocation3], 1024
    $region13: #{tpu_custom_call.1} parent=1 // pred_fallthru
      _
    // Predicated region
    $region14: #{tpu_custom_call.1} parent=1 // pred_check
      _
    $region15: #{tpu_custom_call.1} parent=1 // pred_check_branch
      %38 = sbr.rel (0) target = $region17
    $region16: #{tpu_custom_call.1} parent=1 // pred_region
      %39 = dma.done [#allocation6], 256
    $region17: #{tpu_custom_call.1} parent=1 // pred_fallthru
      _
    %v40 = vld [vmem:[#allocation2] sm:$0xff]
    %v41 = vld [vmem:[#allocation2 + $0x8] sm:$0xff]
    %v42 = vld [vmem:[#allocation2 + $0x10] sm:$0xff]
    %v43 = vld [vmem:[#allocation2 + $0x18] sm:$0xff]
    %v44 = vld [vmem:[#allocation2 + $0x20] sm:$0xff]
    %v45 = vld [vmem:[#allocation2 + $0x28] sm:$0xff]
    %v46 = vld [vmem:[#allocation2 + $0x30] sm:$0xff]
    %v47 = vld [vmem:[#allocation2 + $0x38] sm:$0xff]
    %v48 = vld [vmem:[#allocation5] sm:$0xff]
    %v49 = vld [vmem:[#allocation5 + $0x8] sm:$0xff]
    %v50 = vadd.f32 %v40, %v48
    %v51 = vadd.f32 %v41, %v48
    %v52 = vadd.f32 %v42, %v48
    %v53 = vadd.f32 %v43, %v48
    %v54 = vadd.f32 %v44, %v49
    %v55 = vadd.f32 %v45, %v49
    %v56 = vadd.f32 %v46, %v49
    %v57 = vadd.f32 %v47, %v49
    %58 = vst [vmem:[#allocation7] sm:$0xff] %v50
    %59 = vst [vmem:[#allocation7 + $0x8] sm:$0xff] %v51
    %60 = vst [vmem:[#allocation7 + $0x10] sm:$0xff] %v52
    %61 = vst [vmem:[#allocation7 + $0x18] sm:$0xff] %v53
    %62 = vst [vmem:[#allocation7 + $0x20] sm:$0xff] %v54
    %63 = vst [vmem:[#allocation7 + $0x28] sm:$0xff] %v55
    %64 = vst [vmem:[#allocation7 + $0x30] sm:$0xff] %v56
    %65 = vst [vmem:[#allocation7 + $0x38] sm:$0xff] %v57
    // Predicated region
    $region18: #{tpu_custom_call.1} parent=1 // pred_check
      _
    $region19: #{tpu_custom_call.1} parent=1 // pred_check_branch
      %67 = sbr.rel (0) target = $region21
    $region20: #{tpu_custom_call.1} parent=1 // pred_region
      %s69 = ssub.s32 1024, 1024
      %70 = vsyncadd [#allocation4], %s69
      %s71 = sshll.u32 [#allocation7], 4
      %s72 = int_to_ptr.vmem [resolvable:$true] %s71
      %77 = dma.vmem_to_hbm [thread:$0]  %s72, 1024, %s2, [#allocation4], 512, 512, 32
    $region21: #{tpu_custom_call.1} parent=1 // pred_fallthru
      _
    // Predicated region
    $region22: #{tpu_custom_call.1} parent=1 // pred_check
      _
    $region23: #{tpu_custom_call.1} parent=1 // pred_check_branch
      %79 = sbr.rel (0) target = $region25
    $region24: #{tpu_custom_call.1} parent=1 // pred_region
      %80 = dma.done [#allocation4], 1024
    $region25: #{tpu_custom_call.1} parent=1 // pred_fallthru
      _
    %81 = vsyncpa [#allocation3], 1
    %82 = vsyncpa [#allocation6], 1
    %83 = vsyncpa [#allocation4], 1

</llo_original>
